<compile_context>
chip_gen: v7x
topology: tpu7x:2x2x1
jax: 0.10.0
libtpu: 0.0.40
codegen_flags: <defaults>
</compile_context>

<pallas_src>
import jax
import jax.numpy as jnp
from jax.experimental import pallas as pl
from jax.experimental.pallas import tpu as pltpu

_LANE = 128
_TARGET_BLOCK_BYTES = 4 * 1024 * 1024   # ~4 MiB per block (per array)
_VMEM_LIMIT_BYTES = 32 * 1024 * 1024    # 2 arrays x 2 buffers x 4 MiB = 16 MiB used


def _device_kind():
    try:
        return jax.devices()[0].device_kind.lower()
    except Exception:
        return ""


def _make_kernel(compute_dtype, nr_refine):
    def kernel(params_ref, x_ref, o_ref):
        # params_ref: SMEM (2,) f32 -> [w, 1 + exp(w)]
        # x_ref / o_ref: VMEM tiles (tm, W) in the input's native dtype
        w = params_ref[0]
        num = params_ref[1]
        x = x_ref[...]
        if x.dtype != compute_dtype:
            x = x.astype(compute_dtype)
        wc = w if compute_dtype == jnp.float32 else w.astype(compute_dtype)
        den = 1.0 + jnp.exp(wc - x)                      # VPU add/sub + EUP exp
        den32 = den if den.dtype == jnp.float32 else den.astype(jnp.float32)
        r = pl.reciprocal(den32, approx=True)            # EUP vrcp (otherwise-idle slot)
        if nr_refine:
            # One Newton-Raphson step: ~1e-3 -> ~1e-6 relative error for f32 outputs.
            # Guard den == inf (exp overflow for very negative x): limit is out -> 0.
            r = jnp.where(jnp.isinf(den32), 0.0, r * (2.0 - den32 * r))
        o_ref[...] = (num * r).astype(o_ref.dtype)

    return kernel


def _choose_layout(n_elems, itemsize):
    """Lane-dense 2D view (rows, W) and row-block tm giving ~4 MiB blocks."""
    target_elems = max(_LANE, _TARGET_BLOCK_BYTES // itemsize)
    # Prefer growing W (long contiguous DMA lines, unmasked vst) before tm.
    W = _LANE
    for cand in (16384, 8192, 4096, 2048, 1024, 512, 256, 128):
        if cand <= target_elems and n_elems % cand == 0:
            W = cand
            break
    rows = n_elems // W
    sub = max(8, 32 // itemsize)          # sublane packing: 8 f32 / 16 bf16 / 32 i8
    tm = max(1, target_elems // W)
    if tm >= rows:
        tm = rows                          # full second-to-last dim is always legal
    else:
        tm = max(sub, (tm // sub) * sub)   # respect dtype-packed (sub, 128) tiling
    return rows, W, tm


def _jnp_reference(x, w):
    xf = x.astype(jnp.float32)
    return ((1.0 + jnp.exp(w)) / (1.0 + jnp.exp(w - xf))).astype(x.dtype)


def learnable_sigmoid(x, weight):
    """Apply LearnableSigmoid elementwise via a Pallas TPU kernel."""
    orig_shape = x.shape
    orig_dtype = x.dtype
    w_scalar = weight.reshape(()).astype(jnp.float32)

    flat = x.reshape(-1)
    n = flat.shape[0]
    n_main = (n // _LANE) * _LANE

    if n_main == 0:
        # Fewer than 128 elements: a kernel launch is pure overhead.
        return _jnp_reference(flat, w_scalar).reshape(orig_shape)

    kind = _device_kind()
    is_v7 = "v7" in kind
    # bf16-native math only where it changes the binding unit (v7x, 3.2 TB/s HBM);
    # v5e lacks bf16 VPU/EUP and on v6e it is measured-neutral -> keep f32 there.
    compute_dtype = orig_dtype if (orig_dtype == jnp.bfloat16 and is_v7) else jnp.float32
    nr_refine = orig_dtype == jnp.float32
    dim_sem = (pltpu.CORE_PARALLEL,) if is_v7 else ("parallel",)

    # Hoisted scalars: [w, 1 + exp(w)] ride together in SMEM.
    params = jnp.stack([w_scalar, 1.0 + jnp.exp(w_scalar)])
    itemsize = jnp.dtype(orig_dtype).itemsize
    kernel = _make_kernel(compute_dtype, nr_refine)

    def run(flat_main):
        n_m = flat_main.shape[0]
        rows, W, tm = _choose_layout(n_m, itemsize)
        x2 = flat_main.reshape(rows, W)            # free bitcast (row-major)
        out2 = pl.pallas_call(
            kernel,
            out_shape=jax.ShapeDtypeStruct((rows, W), orig_dtype),
            grid_spec=pltpu.PrefetchScalarGridSpec(
                num_scalar_prefetch=0,
                grid=(pl.cdiv(rows, tm),),
                in_specs=[
                    pl.BlockSpec(memory_space=pltpu.SMEM),      # [w, 1+exp(w)]
                    pl.BlockSpec((tm, W), lambda i: (i, 0)),    # input tile
                ],
                out_specs=pl.BlockSpec((tm, W), lambda i: (i, 0)),
            ),
            compiler_params=pltpu.CompilerParams(
                dimension_semantics=dim_sem,
                vmem_limit_bytes=_VMEM_LIMIT_BYTES,
            ),
            cost_estimate=pl.CostEstimate(
                flops=6 * n_m,
                transcendentals=n_m,
                bytes_accessed=2 * n_m * itemsize,
            ),
        )(params, x2)
        return out2.reshape(-1)

    if n_main == n:
        out_flat = run(flat)
    else:
        # Lane-aligned prefix through the kernel; <128-element tail with plain jnp
        # (avoids the full-tensor pad + out[:n] slice HBM round-trip).
        out_flat = jnp.concatenate(
            [run(flat[:n_main]), _jnp_reference(flat[n_main:], w_scalar)]
        )
    return out_flat.reshape(orig_shape)


if __name__ == "__main__":
    key = jax.random.PRNGKey(0)
    weight = jnp.ones((1, 1, 1), dtype=jnp.float32)   # matches torch.ones(1, 1, 1)
    w0 = weight.reshape(())

    # NCHW-style input, same as the PyTorch module would receive.
    x = jax.random.normal(key, (2, 4, 16, 16), dtype=jnp.float32)
    out = jax.block_until_ready(learnable_sigmoid(x, weight))
    ref = (1.0 + jnp.exp(w0)) / (1.0 + jnp.exp(w0 - x))
    assert out.shape == x.shape and out.dtype == x.dtype
    assert jnp.allclose(out, ref, atol=1e-5, rtol=1e-5), "mismatch vs reference (f32)"

    # Non-lane-aligned total size + native bf16 HBM I/O path.
    xb = jax.random.normal(jax.random.PRNGKey(1), (3, 5, 7, 11), dtype=jnp.float32)
    xb = xb.astype(jnp.bfloat16)
    outb = jax.block_until_ready(learnable_sigmoid(xb, weight))
    refb = (1.0 + jnp.exp(w0)) / (1.0 + jnp.exp(w0 - xb.astype(jnp.float32)))
    assert outb.shape == xb.shape and outb.dtype == xb.dtype
    assert jnp.allclose(outb.astype(jnp.float32), refb, atol=2e-2, rtol=2e-2), \
        "mismatch vs reference (bf16)"

    print("KERNEL_OK")
</pallas_src>

<mosaic_0001>
module attributes {stable_mosaic.version = 11 : i64} {
  func.func @kernel(%arg0: i32, %arg1: memref<2xf32, #tpu.memory_space<smem>>, %arg2: memref<1x2048xf32, #tpu.memory_space<vmem>>, %arg3: memref<1x2048xf32, #tpu.memory_space<vmem>>) attributes {dimension_semantics = [#tpu.dimension_semantics<parallel>], iteration_bounds = array<i64: 1>, scalar_prefetch = 0 : i64, scratch_operands = 0 : i64, tpu.core_type = #tpu.core_type<tc>, window_params = [{transform_indices = @transform_0, window_bounds = array<i64: 2>}, {transform_indices = @transform_1, window_bounds = array<i64: 1, 2048>}, {transform_indices = @transform_2, window_bounds = array<i64: 1, 2048>}]} {
    %c0 = arith.constant 0 : index
    %0 = memref.load %arg1[%c0] : memref<2xf32, #tpu.memory_space<smem>>
    %c1 = arith.constant 1 : index
    %1 = memref.load %arg1[%c1] : memref<2xf32, #tpu.memory_space<smem>>
    %c0_0 = arith.constant 0 : index
    %c0_1 = arith.constant 0 : index
    %2 = vector.load %arg2[%c0_0, %c0_1] : memref<1x2048xf32, #tpu.memory_space<vmem>>, vector<1x2048xf32>
    %3 = vector.broadcast %0 : f32 to vector<1x2048xf32>
    %4 = arith.subf %3, %2 : vector<1x2048xf32>
    %5 = math.exp %4 : vector<1x2048xf32>
    %cst = arith.constant 1.000000e+00 : f32
    %6 = vector.broadcast %cst : f32 to vector<1x2048xf32>
    %7 = arith.addf %6, %5 : vector<1x2048xf32>
    %8 = tpu.reciprocal %7 {approx = true} : vector<1x2048xf32> -> vector<1x2048xf32>
    %9 = math.absf %7 : vector<1x2048xf32>
    %cst_2 = arith.constant 0x7F800000 : f32
    %10 = vector.broadcast %cst_2 : f32 to vector<1x2048xf32>
    %11 = arith.cmpf oeq, %9, %10 : vector<1x2048xf32>
    %12 = arith.mulf %7, %8 : vector<1x2048xf32>
    %cst_3 = arith.constant 2.000000e+00 : f32
    %13 = vector.broadcast %cst_3 : f32 to vector<1x2048xf32>
    %14 = arith.subf %13, %12 : vector<1x2048xf32>
    %15 = arith.mulf %8, %14 : vector<1x2048xf32>
    %cst_4 = arith.constant 0.000000e+00 : f32
    %16 = vector.broadcast %cst_4 : f32 to vector<1x2048xf32>
    %17 = arith.select %11, %16, %15 : vector<1x2048xi1>, vector<1x2048xf32>
    %18 = vector.broadcast %1 : f32 to vector<1x2048xf32>
    %19 = arith.mulf %18, %17 : vector<1x2048xf32>
    %c0_5 = arith.constant 0 : index
    %c0_6 = arith.constant 0 : index
    %20 = vector.load %arg3[%c0_5, %c0_6] : memref<1x2048xf32, #tpu.memory_space<vmem>>, vector<1x2048xf32>
    tpu.vector_store %arg3[%c0_5, %c0_6], %19 {strides = array<i32>} : memref<1x2048xf32, #tpu.memory_space<vmem>>, vector<1x2048xf32>,
    return
  }
  func.func @transform_0(%arg0: i32) -> i32 {
    %c0_i32 = arith.constant 0 : i32
    %c0_i32_0 = arith.constant 0 : i32
    return %c0_i32 : i32
  }
  func.func @transform_1(%arg0: i32) -> (i32, i32) {
    %c0_i32 = arith.constant 0 : i32
    %c0_i32_0 = arith.constant 0 : i32
    return %arg0, %c0_i32 : i32, i32
  }
  func.func @transform_2(%arg0: i32) -> (i32, i32) {
    %c0_i32 = arith.constant 0 : i32
    %c0_i32_0 = arith.constant 0 : i32
    return %arg0, %c0_i32 : i32, i32
  }
}

</mosaic_0001>

<llo_original>
// kernel: tpu_custom_call.1
$region0: #{tpu_custom_call.1}
  #allocation0 [shape = 'u32[]', space=smem, size = 0x4, offset = 0x4, fixed_abs, tag = 'smem constant byte address 0x4 - core index']
  #allocation1 [shape = 'u32[144,128]{1,0:T(1,128)}', space=vmem, size = 0x12000, scoped, tag = 'internal scratch']
  %s0 = inlined_call_operand.hbm [shape: f32[2], index: 0, kind: input, shape index: {}]
  %s1 = inlined_call_operand.hbm [shape: f32[1,2048], index: 1, kind: input, shape index: {}]
  %s2 = inlined_call_operand.hbm [shape: f32[1,2048], index: 2, kind: output, shape index: {}]
  %s3 = sld [smem:[#allocation0]]
  $region26: #{tpu_custom_call.1} parent=0
    _
  %s5 = ssub.s32 1, %s3
  %s6 = scalar_select 0, %s5, %s3
  $region1: #{tpu_custom_call.1} parent=0
    #allocation2 [shape = 'u8[512]{0}', space=smem, size = 0x200, scoped, tag = 'input window, operand 0, single buffered']
    #allocation3 [shape = 's32[1]{0}', space=sflag, size = 0x4, scoped, tag = 'scoped memory for tpu_custom_call.1']
    #allocation4 [shape = 's32[1]{0}', space=sflag, size = 0x4, scoped, tag = 'scoped memory for tpu_custom_call.1']
    #allocation5 [shape = 's32[1]{0}', space=sflag, size = 0x4, scoped, tag = 'scoped memory for tpu_custom_call.1']
    #allocation6 [shape = 'u8[8192]{0}', space=vmem, size = 0x2000, scoped, tag = 'input window, operand 1, single buffered']
    #allocation7 [shape = 'u8[8192]{0}', space=vmem, size = 0x2000, scoped, tag = 'output window, operand 0, single buffered']
    %7 = vsyncpa [#allocation5], 0
    %8 = vsyncpa [#allocation3], 0
    %9 = vsyncpa [#allocation4], 0
    // Predicated region
    $region2: #{tpu_custom_call.1} parent=1 // pred_check
      _
    $region3: #{tpu_custom_call.1} parent=1 // pred_check_branch
      %11 = sbr.rel (0) target = $region5
    $region4: #{tpu_custom_call.1} parent=1 // pred_region
      %s13 = ssub.s32 16, 16
      %14 = vsyncadd [#allocation5], %s13
      %17 = dma.hbm_to_smem %s0, 16, [#allocation2], [#allocation5]
    $region5: #{tpu_custom_call.1} parent=1 // pred_fallthru
      _
    // Predicated region
    $region6: #{tpu_custom_call.1} parent=1 // pred_check
      _
    $region7: #{tpu_custom_call.1} parent=1 // pred_check_branch
      %19 = sbr.rel (0) target = $region9
    $region8: #{tpu_custom_call.1} parent=1 // pred_region
      %s21 = ssub.s32 256, 256
      %22 = vsyncadd [#allocation3], %s21
      %s24 = sshll.u32 [#allocation6], 4
      %s25 = int_to_ptr.vmem [resolvable:$true] %s24
      %27 = dma.hbm_to_vmem [thread:$0]  %s1, 256, %s25, [#allocation3]
    $region9: #{tpu_custom_call.1} parent=1 // pred_fallthru
      _
    // Predicated region
    $region10: #{tpu_custom_call.1} parent=1 // pred_check
      _
    $region11: #{tpu_custom_call.1} parent=1 // pred_check_branch
      %29 = sbr.rel (0) target = $region13
    $region12: #{tpu_custom_call.1} parent=1 // pred_region
      %30 = dma.done [#allocation5], 16
    $region13: #{tpu_custom_call.1} parent=1 // pred_fallthru
      _
    // Predicated region
    $region14: #{tpu_custom_call.1} parent=1 // pred_check
      _
    $region15: #{tpu_custom_call.1} parent=1 // pred_check_branch
      %32 = sbr.rel (0) target = $region17
    $region16: #{tpu_custom_call.1} parent=1 // pred_region
      %33 = dma.done [#allocation3], 256
    $region17: #{tpu_custom_call.1} parent=1 // pred_fallthru
      _
    %34 = sfence
    %s35 = sld [smem:[#allocation2]]
    %s36 = sld [smem:[#allocation2 + $0x1]]
    %v37 = vld [vmem:[#allocation6] sm:$0xff]
    %v38 = vld [vmem:[#allocation6 + $0x8] sm:$0xff]
    %v39 = vstv %s35
    %v40 = vsub.f32 %v39, %v37
    %v41 = vsub.f32 %v39, %v38
    %v42 = vmul.f32 %v40, 1.442695
    %v43 = vpow.pop %v42
    %v44 = vmul.f32 %v41, 1.442695
    %v45 = vpow.pop %v44
    %v46 = vadd.f32 %v43, 1.0
    %v47 = vadd.f32 %v45, 1.0
    %v48 = vrcp.pop %v46
    %v49 = vrcp.pop %v47
    %v50 = vand.u32 2147483647, %v46
    %v51 = vand.u32 2147483647, %v47
    %vm52 = vcmp.eq.f32.partialorder %v50, inf
    %vm53 = vcmp.eq.f32.partialorder %v51, inf
    %v54 = vmul.f32 %v46, %v48
    %v55 = vmul.f32 %v47, %v49
    %v56 = vsub.f32 2.0, %v54
    %v57 = vsub.f32 2.0, %v55
    %v58 = vmul.f32 %v48, %v56
    %v59 = vmul.f32 %v49, %v57
    %v60 = vsel %vm52, 0.0, %v58
    %v61 = vsel %vm53, 0.0, %v59
    %v62 = vstv %s36
    %v63 = vmul.f32 %v62, %v60
    %v64 = vmul.f32 %v62, %v61
    %65 = vst [vmem:[#allocation7] sm:$0xff] %v63
    %66 = vst [vmem:[#allocation7 + $0x8] sm:$0xff] %v64
    // Predicated region
    $region18: #{tpu_custom_call.1} parent=1 // pred_check
      _
    $region19: #{tpu_custom_call.1} parent=1 // pred_check_branch
      %68 = sbr.rel (0) target = $region21
    $region20: #{tpu_custom_call.1} parent=1 // pred_region
      %s70 = ssub.s32 256, 256
      %71 = vsyncadd [#allocation4], %s70
      %s73 = sshll.u32 [#allocation7], 4
      %s74 = int_to_ptr.vmem [resolvable:$true] %s73
      %76 = dma.vmem_to_hbm [thread:$0]  %s74, 256, %s2, [#allocation4]
    $region21: #{tpu_custom_call.1} parent=1 // pred_fallthru
      _
    // Predicated region
    $region22: #{tpu_custom_call.1} parent=1 // pred_check
      _
    $region23: #{tpu_custom_call.1} parent=1 // pred_check_branch
      %78 = sbr.rel (0) target = $region25
    $region24: #{tpu_custom_call.1} parent=1 // pred_region
      %79 = dma.done [#allocation4], 256
    $region25: #{tpu_custom_call.1} parent=1 // pred_fallthru
      _
    %80 = vsyncpa [#allocation3], 1
    %81 = vsyncpa [#allocation4], 1
    %82 = vsyncpa [#allocation5], 1

</llo_original>
